<compile_context>
chip_gen: v5e
topology: v5e:2x2
jax: 0.10.0
libtpu: 0.0.40
codegen_flags: <defaults>
</compile_context>

<pallas_src>
import functools

import jax
import jax.numpy as jnp
from jax.experimental import pallas as pl
from jax.experimental.pallas import tpu as pltpu


def qnet_kernel(x_ref, w1_ref, b1_ref, w2_ref, b2_ref, out_ref, *, state_dim):
    # ---- fc1 on the VPU: depth-`state_dim` contraction as broadcast FMAs ----
    # h starts as the broadcast bias (folds the bias add), then accumulates
    # x[:, k:k+1] * w1[k:k+1, :] per input feature. state_dim is static, so
    # this Python loop fully unrolls into VALU ops (no MXU round trip for a
    # depth-4 contraction).
    h = b1_ref[...] + x_ref[:, 0:1] * w1_ref[0:1, :]
    for k in range(1, state_dim):
        h = h + x_ref[:, k : k + 1] * w1_ref[k : k + 1, :]
    h = jnp.maximum(h, 0.0)  # ReLU

    # ---- fc2 on the MXU: (tb, H) @ (H, action_dim) + bias ----
    q = jnp.dot(h, w2_ref[...], preferred_element_type=jnp.float32)
    q = q + b2_ref[...]
    # Narrow (tb, action_dim) store: masked vst, same vreg count as a 128-wide
    # store, ~64x less HBM write traffic.
    out_ref[...] = q.astype(out_ref.dtype)


def qnet_forward(x, w1, b1, w2, b2, *, batch_tile=1024):
    """x: (B, state_dim) f32. Returns (B, action_dim) Q-values (f32).

    Weights are (in, out): w1 (state_dim, hidden), w2 (hidden, action_dim);
    biases are (1, hidden) / (1, action_dim).
    """
    B, state_dim = x.shape
    hidden_dim = w1.shape[1]
    action_dim = w2.shape[1]

    # Batch tile: small batches -> one tile rounded up to the 8-sublane
    # multiple (common DQN batch sizes 32..256 hit b_padded == B, so no pad op
    # at all). Large batches -> 1024-row tiles; grid >= 2 once B > 2*tile,
    # which is what lets the "parallel" axis shard across v7x's two cores.
    tb = min(batch_tile, max(8, ((B + 7) // 8) * 8))
    b_padded = ((B + tb - 1) // tb) * tb
    if b_padded != B:
        x = jnp.pad(x, ((0, b_padded - B), (0, 0)))
    grid = (b_padded // tb,)

    kernel = functools.partial(qnet_kernel, state_dim=state_dim)

    flops = 2 * b_padded * (state_dim * hidden_dim + hidden_dim * action_dim)
    bytes_accessed = 4 * (
        b_padded * state_dim                     # x
        + state_dim * hidden_dim + hidden_dim    # w1, b1
        + hidden_dim * action_dim + action_dim   # w2, b2
        + b_padded * action_dim                  # out (narrow)
    )

    q_full = pl.pallas_call(
        kernel,
        out_shape=jax.ShapeDtypeStruct((b_padded, action_dim), jnp.float32),
        grid=grid,
        in_specs=[
            pl.BlockSpec((tb, state_dim), lambda i: (i, 0)),          # x: streamed
            pl.BlockSpec((state_dim, hidden_dim), lambda i: (0, 0)),  # w1: resident
            pl.BlockSpec((1, hidden_dim), lambda i: (0, 0)),          # b1: resident
            pl.BlockSpec((hidden_dim, action_dim), lambda i: (0, 0)), # w2: resident
            pl.BlockSpec((1, action_dim), lambda i: (0, 0)),          # b2: resident
        ],
        out_specs=pl.BlockSpec((tb, action_dim), lambda i: (i, 0)),
        compiler_params=pltpu.CompilerParams(
            dimension_semantics=("parallel",),
        ),
        cost_estimate=pl.CostEstimate(
            flops=flops, transcendentals=0, bytes_accessed=bytes_accessed
        ),
    )(x, w1, b1, w2, b2)

    # Strip batch-padding rows only when we actually padded.
    return q_full if b_padded == B else q_full[:B]


def init_qnet_params(key, state_dim, hidden_dim, action_dim):
    """Deterministic PyTorch-style init: U(-1/sqrt(fan_in), +1/sqrt(fan_in))."""
    k1, k2, k3, k4 = jax.random.split(key, 4)
    bound1 = 1.0 / jnp.sqrt(jnp.float32(state_dim))
    bound2 = 1.0 / jnp.sqrt(jnp.float32(hidden_dim))
    # Stored as (in, out) so the kernel does x @ W (torch stores (out, in)).
    w1 = jax.random.uniform(k1, (state_dim, hidden_dim), jnp.float32, -bound1, bound1)
    b1 = jax.random.uniform(k2, (1, hidden_dim), jnp.float32, -bound1, bound1)
    w2 = jax.random.uniform(k3, (hidden_dim, action_dim), jnp.float32, -bound2, bound2)
    b2 = jax.random.uniform(k4, (1, action_dim), jnp.float32, -bound2, bound2)
    return w1, b1, w2, b2


if __name__ == "__main__":
    # CartPole-v0: state_dim=4, action_dim=2; hidden_dim=128 per the module.
    state_dim, hidden_dim, action_dim = 4, 128, 2
    batch = 8

    key = jax.random.PRNGKey(0)
    k_params, k_x = jax.random.split(key)
    w1, b1, w2, b2 = init_qnet_params(k_params, state_dim, hidden_dim, action_dim)
    x = jax.random.normal(k_x, (batch, state_dim), jnp.float32)

    q = qnet_forward(x, w1, b1, w2, b2)
    q = jax.block_until_ready(q)

    # Pure-JAX reference check.
    ref = jnp.maximum(x @ w1 + b1, 0.0) @ w2 + b2
    assert q.shape == (batch, action_dim)
    assert jnp.allclose(q, ref, atol=1e-5, rtol=1e-5)

    # Batch-padded single-tile path (B not a multiple of 8).
    xb = jax.random.normal(jax.random.PRNGKey(1), (777, state_dim), jnp.float32)
    qb = jax.block_until_ready(qnet_forward(xb, w1, b1, w2, b2))
    refb = jnp.maximum(xb @ w1 + b1, 0.0) @ w2 + b2
    assert qb.shape == (777, action_dim)
    assert jnp.allclose(qb, refb, atol=1e-5, rtol=1e-5)

    # Multi-tile gridded path (grid length > 1, exercises the streamed batch).
    xc = jax.random.normal(jax.random.PRNGKey(2), (2500, state_dim), jnp.float32)
    qc = jax.block_until_ready(qnet_forward(xc, w1, b1, w2, b2))
    refc = jnp.maximum(xc @ w1 + b1, 0.0) @ w2 + b2
    assert qc.shape == (2500, action_dim)
    assert jnp.allclose(qc, refc, atol=1e-5, rtol=1e-5)

    print("KERNEL_OK")
</pallas_src>

<mosaic_0001>
module attributes {stable_mosaic.version = 11 : i64} {
  func.func @qnet_kernel(%arg0: i32, %arg1: memref<8x4xf32, #tpu.memory_space<vmem>>, %arg2: memref<4x128xf32, #tpu.memory_space<vmem>>, %arg3: memref<1x128xf32, #tpu.memory_space<vmem>>, %arg4: memref<128x2xf32, #tpu.memory_space<vmem>>, %arg5: memref<1x2xf32, #tpu.memory_space<vmem>>, %arg6: memref<8x2xf32, #tpu.memory_space<vmem>>) attributes {dimension_semantics = [#tpu.dimension_semantics<parallel>], iteration_bounds = array<i64: 1>, scalar_prefetch = 0 : i64, scratch_operands = 0 : i64, tpu.core_type = #tpu.core_type<tc>, window_params = [{transform_indices = @transform_0, window_bounds = array<i64: 8, 4>}, {pipeline_mode = #tpu.pipeline_mode<synchronous>, transform_indices = @transform_1, window_bounds = array<i64: 4, 128>}, {pipeline_mode = #tpu.pipeline_mode<synchronous>, transform_indices = @transform_2, window_bounds = array<i64: 1, 128>}, {pipeline_mode = #tpu.pipeline_mode<synchronous>, transform_indices = @transform_3, window_bounds = array<i64: 128, 2>}, {pipeline_mode = #tpu.pipeline_mode<synchronous>, transform_indices = @transform_4, window_bounds = array<i64: 1, 2>}, {transform_indices = @transform_5, window_bounds = array<i64: 8, 2>}]} {
    %c0 = arith.constant 0 : index
    %c0_0 = arith.constant 0 : index
    %0 = vector.load %arg3[%c0, %c0_0] : memref<1x128xf32, #tpu.memory_space<vmem>>, vector<1x128xf32>
    %c0_1 = arith.constant 0 : index
    %c0_2 = arith.constant 0 : index
    %1 = vector.load %arg1[%c0_1, %c0_2] : memref<8x4xf32, #tpu.memory_space<vmem>>, vector<8x1xf32>
    %c0_3 = arith.constant 0 : index
    %c0_4 = arith.constant 0 : index
    %2 = vector.load %arg2[%c0_3, %c0_4] : memref<4x128xf32, #tpu.memory_space<vmem>>, vector<1x128xf32>
    %3 = vector.broadcast %1 : vector<8x1xf32> to vector<8x128xf32>
    %4 = vector.broadcast %2 : vector<1x128xf32> to vector<8x128xf32>
    %5 = arith.mulf %3, %4 : vector<8x128xf32>
    %6 = vector.broadcast %0 : vector<1x128xf32> to vector<8x128xf32>
    %7 = arith.addf %6, %5 : vector<8x128xf32>
    %c0_5 = arith.constant 0 : index
    %c1 = arith.constant 1 : index
    %8 = vector.load %arg1[%c0_5, %c1] : memref<8x4xf32, #tpu.memory_space<vmem>>, vector<8x1xf32>
    %c1_6 = arith.constant 1 : index
    %c0_7 = arith.constant 0 : index
    %9 = vector.load %arg2[%c1_6, %c0_7] : memref<4x128xf32, #tpu.memory_space<vmem>>, vector<1x128xf32>
    %10 = vector.broadcast %8 : vector<8x1xf32> to vector<8x128xf32>
    %11 = vector.broadcast %9 : vector<1x128xf32> to vector<8x128xf32>
    %12 = arith.mulf %10, %11 : vector<8x128xf32>
    %13 = arith.addf %7, %12 : vector<8x128xf32>
    %c0_8 = arith.constant 0 : index
    %c2 = arith.constant 2 : index
    %14 = vector.load %arg1[%c0_8, %c2] : memref<8x4xf32, #tpu.memory_space<vmem>>, vector<8x1xf32>
    %c2_9 = arith.constant 2 : index
    %c0_10 = arith.constant 0 : index
    %15 = vector.load %arg2[%c2_9, %c0_10] : memref<4x128xf32, #tpu.memory_space<vmem>>, vector<1x128xf32>
    %16 = vector.broadcast %14 : vector<8x1xf32> to vector<8x128xf32>
    %17 = vector.broadcast %15 : vector<1x128xf32> to vector<8x128xf32>
    %18 = arith.mulf %16, %17 : vector<8x128xf32>
    %19 = arith.addf %13, %18 : vector<8x128xf32>
    %c0_11 = arith.constant 0 : index
    %c3 = arith.constant 3 : index
    %20 = vector.load %arg1[%c0_11, %c3] : memref<8x4xf32, #tpu.memory_space<vmem>>, vector<8x1xf32>
    %c3_12 = arith.constant 3 : index
    %c0_13 = arith.constant 0 : index
    %21 = vector.load %arg2[%c3_12, %c0_13] : memref<4x128xf32, #tpu.memory_space<vmem>>, vector<1x128xf32>
    %22 = vector.broadcast %20 : vector<8x1xf32> to vector<8x128xf32>
    %23 = vector.broadcast %21 : vector<1x128xf32> to vector<8x128xf32>
    %24 = arith.mulf %22, %23 : vector<8x128xf32>
    %25 = arith.addf %19, %24 : vector<8x128xf32>
    %cst = arith.constant 0.000000e+00 : f32
    %26 = vector.broadcast %cst : f32 to vector<8x128xf32>
    %27 = arith.maximumf %25, %26 : vector<8x128xf32>
    %c0_14 = arith.constant 0 : index
    %c0_15 = arith.constant 0 : index
    %28 = vector.load %arg4[%c0_14, %c0_15] : memref<128x2xf32, #tpu.memory_space<vmem>>, vector<128x2xf32>
    %cst_16 = arith.constant dense<0.000000e+00> : vector<8x2xf32>
    %29 = tpu.matmul %27, %28, %cst_16 {dimension_numbers = #tpu.dot_dimension_numbers<[1], [0], [0], [1], [0, 0, 1, 1], [], []>} : vector<8x128xf32>, vector<128x2xf32>, vector<8x2xf32> -> vector<8x2xf32>
    %c0_17 = arith.constant 0 : index
    %c0_18 = arith.constant 0 : index
    %30 = vector.load %arg5[%c0_17, %c0_18] : memref<1x2xf32, #tpu.memory_space<vmem>>, vector<1x2xf32>
    %31 = vector.broadcast %30 : vector<1x2xf32> to vector<8x2xf32>
    %32 = arith.addf %29, %31 : vector<8x2xf32>
    %c0_19 = arith.constant 0 : index
    %c0_20 = arith.constant 0 : index
    %33 = vector.load %arg6[%c0_19, %c0_20] : memref<8x2xf32, #tpu.memory_space<vmem>>, vector<8x2xf32>
    tpu.vector_store %arg6[%c0_19, %c0_20], %32 {strides = array<i32>} : memref<8x2xf32, #tpu.memory_space<vmem>>, vector<8x2xf32>,
    return
  }
  func.func @transform_0(%arg0: i32) -> (i32, i32) {
    %c0_i32 = arith.constant 0 : i32
    %c0_i32_0 = arith.constant 0 : i32
    return %arg0, %c0_i32 : i32, i32
  }
  func.func @transform_1(%arg0: i32) -> (i32, i32) {
    %c0_i32 = arith.constant 0 : i32
    %c0_i32_0 = arith.constant 0 : i32
    %c0_i32_1 = arith.constant 0 : i32
    return %c0_i32, %c0_i32_0 : i32, i32
  }
  func.func @transform_2(%arg0: i32) -> (i32, i32) {
    %c0_i32 = arith.constant 0 : i32
    %c0_i32_0 = arith.constant 0 : i32
    %c0_i32_1 = arith.constant 0 : i32
    return %c0_i32, %c0_i32_0 : i32, i32
  }
  func.func @transform_3(%arg0: i32) -> (i32, i32) {
    %c0_i32 = arith.constant 0 : i32
    %c0_i32_0 = arith.constant 0 : i32
    %c0_i32_1 = arith.constant 0 : i32
    return %c0_i32, %c0_i32_0 : i32, i32
  }
  func.func @transform_4(%arg0: i32) -> (i32, i32) {
    %c0_i32 = arith.constant 0 : i32
    %c0_i32_0 = arith.constant 0 : i32
    %c0_i32_1 = arith.constant 0 : i32
    return %c0_i32, %c0_i32_0 : i32, i32
  }
  func.func @transform_5(%arg0: i32) -> (i32, i32) {
    %c0_i32 = arith.constant 0 : i32
    %c0_i32_0 = arith.constant 0 : i32
    return %arg0, %c0_i32 : i32, i32
  }
}

</mosaic_0001>

<llo_original>
// kernel: tpu_custom_call.1
$region0: #{tpu_custom_call.1}
  #allocation0 [shape = 'u32[]', space=smem, size = 0x4, offset = 0x4, fixed_abs, tag = 'smem constant byte address 0x4 - core index']
  #allocation1 [shape = 'u32[72,128]{1,0:T(1,128)}', space=vmem, size = 0x9000, scoped, tag = 'internal scratch']
  %s0 = inlined_call_operand.vmem [shape: f32[8,4], index: 0, kind: input, shape index: {}]
  %s1 = inlined_call_operand.vmem [shape: f32[4,128], index: 1, kind: input, shape index: {}]
  %s2 = inlined_call_operand.vmem [shape: f32[1,128], index: 2, kind: input, shape index: {}]
  %s3 = inlined_call_operand.vmem [shape: f32[128,2], index: 3, kind: input, shape index: {}]
  %s4 = inlined_call_operand.vmem [shape: f32[1,2], index: 4, kind: input, shape index: {}]
  %s5 = inlined_call_operand.vmem [shape: f32[8,2], index: 5, kind: output, shape index: {}]
  %s6 = sld [smem:[#allocation0]]
  $region30: #{tpu_custom_call.1} parent=0
    _
  %s8 = ssub.s32 1, %s6
  %s9 = scalar_select 0, %s8, %s6
  // Predicated region
  $region2: #{tpu_custom_call.1} parent=0 // pred_check
    _
  $region3: #{tpu_custom_call.1} parent=0 // pred_check_branch
    %11 = sbr.rel (0) target = $region5
  $region4: #{tpu_custom_call.1} parent=0 // pred_region
    _
  $region5: #{tpu_custom_call.1} parent=0 // pred_fallthru
    _
  // Predicated region
  $region6: #{tpu_custom_call.1} parent=0 // pred_check
    _
  $region7: #{tpu_custom_call.1} parent=0 // pred_check_branch
    %13 = sbr.rel (0) target = $region9
  $region8: #{tpu_custom_call.1} parent=0 // pred_region
    _
  $region9: #{tpu_custom_call.1} parent=0 // pred_fallthru
    _
  // Predicated region
  $region10: #{tpu_custom_call.1} parent=0 // pred_check
    _
  $region11: #{tpu_custom_call.1} parent=0 // pred_check_branch
    %15 = sbr.rel (0) target = $region13
  $region12: #{tpu_custom_call.1} parent=0 // pred_region
    _
  $region13: #{tpu_custom_call.1} parent=0 // pred_fallthru
    _
  // Predicated region
  $region14: #{tpu_custom_call.1} parent=0 // pred_check
    _
  $region15: #{tpu_custom_call.1} parent=0 // pred_check_branch
    %17 = sbr.rel (0) target = $region17
  $region16: #{tpu_custom_call.1} parent=0 // pred_region
    _
  $region17: #{tpu_custom_call.1} parent=0 // pred_fallthru
    _
  // Predicated region
  $region18: #{tpu_custom_call.1} parent=0 // pred_check
    _
  $region19: #{tpu_custom_call.1} parent=0 // pred_check_branch
    %19 = sbr.rel (0) target = $region21
  $region20: #{tpu_custom_call.1} parent=0 // pred_region
    _
  $region21: #{tpu_custom_call.1} parent=0 // pred_fallthru
    _
  %v20 = vld [vmem:[%s2] sm:$0x1]
  %v21 = vld [vmem:[%s0] sm:$0xff]
  %v22 = vld [vmem:[%s1] sm:$0x1]
  %24 = vset.pattern.permute.xlu0 0
  %25 = vperm.xlu0 %24, %v21
  %v26 = vpop.permute.xlu0 %25
  %v28 = vperm.slane %v22, 0
  %v29 = vmul.f32 %v26, %v28
  %v31 = vperm.slane %v20, 0
  %v33 = vadd.f32 %v31, %v29
  %v34 = vld [vmem:[%s1 + $0x1] sm:$0x1]
  %35 = vset.pattern.permute.xlu0 1
  %36 = vperm.xlu0 %35, %v21
  %v37 = vpop.permute.xlu0 %36
  %v39 = vperm.slane %v34, 0
  %v40 = vmul.f32 %v37, %v39
  %v41 = vadd.f32 %v33, %v40
  %v42 = vld [vmem:[%s1 + $0x2] sm:$0x1]
  %43 = vset.pattern.permute.xlu0 2
  %44 = vperm.xlu0 %43, %v21
  %v45 = vpop.permute.xlu0 %44
  %v47 = vperm.slane %v42, 0
  %v48 = vmul.f32 %v45, %v47
  %v49 = vadd.f32 %v41, %v48
  %v50 = vld [vmem:[%s1 + $0x3] sm:$0x1]
  %51 = vset.pattern.permute.xlu0 3
  %52 = vperm.xlu0 %51, %v21
  %v53 = vpop.permute.xlu0 %52
  %v55 = vperm.slane %v50, 0
  %v56 = vmul.f32 %v53, %v55
  %v57 = vadd.f32 %v49, %v56
  %v58 = vmax.f32 %v57, 0.0
  %v59 = vld [vmem:[%s3] sm:$0xff]
  %v60 = vld [vmem:[%s3 + $0x8] sm:$0xff]
  %v61 = vld [vmem:[%s3 + $0x10] sm:$0xff]
  %v62 = vld [vmem:[%s3 + $0x18] sm:$0xff]
  %v63 = vld [vmem:[%s3 + $0x20] sm:$0xff]
  %v64 = vld [vmem:[%s3 + $0x28] sm:$0xff]
  %v65 = vld [vmem:[%s3 + $0x30] sm:$0xff]
  %v66 = vld [vmem:[%s3 + $0x38] sm:$0xff]
  %v67 = vld [vmem:[%s3 + $0x40] sm:$0xff]
  %v68 = vld [vmem:[%s3 + $0x48] sm:$0xff]
  %v69 = vld [vmem:[%s3 + $0x50] sm:$0xff]
  %v70 = vld [vmem:[%s3 + $0x58] sm:$0xff]
  %v71 = vld [vmem:[%s3 + $0x60] sm:$0xff]
  %v72 = vld [vmem:[%s3 + $0x68] sm:$0xff]
  %v73 = vld [vmem:[%s3 + $0x70] sm:$0xff]
  %v74 = vld [vmem:[%s3 + $0x78] sm:$0xff]
  %v75 = vld [vmem:[%s4] sm:$0x1]
  %v77 = vperm.slane %v75, 0
  %79 = vmatpush.msra.mxu0 %v74
  %80 = vmatpush.msra.mxu0 %v73
  %81 = vmatpush.msra.mxu0 %v72
  %82 = vmatpush.msra.mxu0 %v71
  %83 = vmatpush.msra.mxu0 %v70
  %84 = vmatpush.msra.mxu0 %v69
  %85 = vmatpush.msra.mxu0 %v68
  %86 = vmatpush.msra.mxu0 %v67
  %87 = vmatpush.msra.mxu0 %v66
  %88 = vmatpush.msra.mxu0 %v65
  %89 = vmatpush.msra.mxu0 %v64
  %90 = vmatpush.msra.mxu0 %v63
  %91 = vmatpush.msra.mxu0 %v62
  %92 = vmatpush.msra.mxu0 %v61
  %93 = vmatpush.msra.mxu0 %v60
  %94 = vmatpush.msra.mxu0 %v59
  %95 = vmatmul.f32.gmra.mxu0 %v58
  %v96 = vpop.f32.mrf.mxu0
  %v97 = vadd.f32 %v77, %v96
  %98 = vdwg.mxu0
  %vm99 = vcmask 15360
  %100 = vst.msk [vmem:[%s5] sm:$0xff] %vm99, %v97
  // Predicated region
  $region22: #{tpu_custom_call.1} parent=0 // pred_check
    _
  $region23: #{tpu_custom_call.1} parent=0 // pred_check_branch
    %102 = sbr.rel (0) target = $region25
  $region24: #{tpu_custom_call.1} parent=0 // pred_region
    _
  $region25: #{tpu_custom_call.1} parent=0 // pred_fallthru
    _
  // Predicated region
  $region26: #{tpu_custom_call.1} parent=0 // pred_check
    _
  $region27: #{tpu_custom_call.1} parent=0 // pred_check_branch
    %104 = sbr.rel (0) target = $region29
  $region28: #{tpu_custom_call.1} parent=0 // pred_region
    _
  $region29: #{tpu_custom_call.1} parent=0 // pred_fallthru
    _

</llo_original>
